<compile_context>
chip_gen: v7x
topology: tpu7x:2x2x1
jax: 0.10.0
libtpu: 0.0.40
codegen_flags: <defaults>
</compile_context>

<pallas_src>
import functools

import jax
import jax.numpy as jnp
import numpy as np
from jax.experimental import pallas as pl
from jax.experimental.pallas import tpu as pltpu


def _round_up(x: int, m: int) -> int:
    return ((x + m - 1) // m) * m


# ----------------------------------------------------------------------------
# Pallas kernel: masked mean, m_attr_output linear, gamma blend, vocab logits.
# ----------------------------------------------------------------------------
def _attr_net_kernel(
    attr_packed_ref,   # (TB, L, Dp)  f32  [user attr emb | item attr emb], lane-packed
    avgw_packed_ref,   # (TB, L, Dp)  f32  normalized mean weights, pre-broadcast per half
    out_embed_ref,     # (TB, Dp)     f32  [user_embed | item_embed]
    w_ref,             # (Dp, Dp)     f32  m_attr_output weight (packed, resident)
    bias_ref,          # (1, Dp)      f32  m_attr_output bias (resident)
    vocab_t_ref,       # (Dp, Vp)     f32  output_attr_embedding^T (padded, resident)
    logits_ref,        # (TB, Vp)     f32  out: logits over the whole (padded) vocab
    *,
    gamma: float,
):
    # Masked means over the attr sequences: weights already hold valid/count
    # and are lane-broadcast per half in the wrapper -> one full-lane VPU mul
    # + one sublane reduce (no in-kernel lane broadcast, no XLU lane reduce).
    avg = jnp.sum(attr_packed_ref[...] * avgw_packed_ref[...], axis=1)   # (TB, Dp)

    # m_attr_output linear: a single K=Dp MXU matmul against the packed weight.
    attr_lin = (
        jnp.dot(avg, w_ref[...], preferred_element_type=jnp.float32)
        + bias_ref[...]
    )                                                                    # (TB, Dp)

    # gamma blend with the pre-concatenated [user_embed | item_embed].
    output = (1.0 - gamma) * out_embed_ref[...] + gamma * attr_lin       # (TB, Dp)

    # Vocab logits on the MXU: (TB, Dp) @ (Dp, Vp).  Per-target logits are
    # gathered from this small (B, Vp) result in the wrapper.
    logits_ref[...] = jnp.dot(
        output, vocab_t_ref[...], preferred_element_type=jnp.float32
    )


# ----------------------------------------------------------------------------
# Wrapper: padding / gathers / packing / mask construction + pallas_call.
# ----------------------------------------------------------------------------
def attr_network_forward(
    params,
    attr_item, attr_tf_item, attr_lens_item, item_ids,
    attr_user, attr_tf_user, attr_lens_user, user_ids,
    pos_targets, pos_lens, neg_targets, neg_lens,
    *, gamma, batch_tile=128,
):
    del attr_tf_item, attr_tf_user  # unused in the original forward()

    B, L = attr_item.shape
    Lp = pos_targets.shape[1]
    Ln = neg_targets.shape[1]
    V, E = params["attr_emb"].shape

    # Padded sizes: feature axis -> multiple of 128 lanes (Dp = 2*Ep),
    # vocab axis -> multiple of 256 (fills the 2x256 MXU; also mult of 128).
    Ep = _round_up(max(E, 64), 64)
    Dp = 2 * Ep
    Vp = _round_up(max(V, 256), 256)

    # Batch tile: large tiles for MXU/DMA efficiency, clamped to the batch so
    # tiny test batches don't pad to 128 rows.
    TB = max(8, min(_round_up(batch_tile, 8), _round_up(B, 8)))
    B_pad = _round_up(B, TB)

    # ---- pad parameter tables (zero padding keeps all math exact) ----------
    def pad_feat(tab, new_f):
        return jnp.pad(tab, ((0, 0), (0, new_f - tab.shape[1])))

    attr_tab = pad_feat(params["attr_emb"], Ep)      # (V, Ep)
    user_tab = pad_feat(params["user_emb"], Ep)      # (U, Ep)
    item_tab = pad_feat(params["item_emb"], Ep)      # (I, Ep)

    def pad_2e(x):
        # last axis 2E -> Dp, block layout: [first E at 0:E | second E at Ep:Ep+E]
        lead = x.shape[:-1]
        x2 = x.reshape(lead + (2, E))
        x2 = jnp.pad(x2, [(0, 0)] * len(lead) + [(0, 0), (0, Ep - E)])
        return x2.reshape(lead + (Dp,))

    out_attr_tab = pad_2e(params["out_attr_emb"])                   # (V, Dp)
    vocab_t = jnp.pad(out_attr_tab, ((0, Vp - V), (0, 0))).T        # (Dp, Vp)

    w = params["attr_output_w"]                                     # (2E, 2E) (in, out)
    w_rows = jnp.pad(
        w.reshape(2, E, 2 * E), ((0, 0), (0, Ep - E), (0, 0))
    ).reshape(Dp, 2 * E)
    w_pad = pad_2e(w_rows)                                          # (Dp, Dp)
    bias_pad = pad_2e(params["attr_output_b"]).reshape(1, Dp)       # (1, Dp)

    # ---- embedding gathers (XLA glue; see TODO at top) + lane packing ------
    attr_user_emb = attr_tab[attr_user]              # (B, L, Ep)
    attr_item_emb = attr_tab[attr_item]              # (B, L, Ep)
    attr_packed = jnp.concatenate([attr_user_emb, attr_item_emb], axis=-1)  # (B, L, Dp)
    out_embed = jnp.concatenate(
        [user_tab[user_ids], item_tab[item_ids]], axis=-1
    )                                                # (B, Dp)

    # ---- masked-mean weights (valid/count), lane-broadcast per half --------
    def norm_weights(lens, seq_len):
        valid = (
            jnp.arange(seq_len)[None, :] < lens.astype(jnp.int32)[:, None]
        ).astype(jnp.float32)
        # NOTE: no zero-length guard, matching the PyTorch module semantics.
        return valid / valid.sum(axis=1, keepdims=True)

    avgw_user = norm_weights(attr_lens_user, L)      # (B, L)
    avgw_item = norm_weights(attr_lens_item, L)      # (B, L)
    avgw_packed = jnp.concatenate(
        [jnp.broadcast_to(avgw_user[:, :, None], (B, L, Ep)),
         jnp.broadcast_to(avgw_item[:, :, None], (B, L, Ep))],
        axis=-1,
    )                                                # (B, L, Dp)

    # ---- mask / new_targets: pure functions of lengths (plain JAX) ---------
    pos_mask = jnp.arange(Lp)[None, :] < pos_lens.astype(jnp.int32)[:, None]
    neg_mask = jnp.arange(Ln)[None, :] < neg_lens.astype(jnp.int32)[:, None]
    mask = jnp.concatenate([pos_mask, neg_mask], axis=-1)            # (B, Lp+Ln) bool
    new_targets = (
        jnp.concatenate(
            [jnp.ones_like(pos_targets), jnp.zeros_like(neg_targets)], axis=1
        )
        * mask
    )

    # ---- pad the batch axis so every block is full --------------------------
    def pad_b(x):
        return jnp.pad(x, [(0, B_pad - B)] + [(0, 0)] * (x.ndim - 1))

    attr_packed = pad_b(attr_packed)
    avgw_packed = pad_b(avgw_packed)
    out_embed = pad_b(out_embed)

    # ---- explicit VMEM budget (double-buffered varying tiles + residents) ---
    varying_bytes = 4 * (2 * TB * L * Dp + TB * Dp + TB * Vp)
    resident_bytes = 4 * (Dp * Dp + Dp + Dp * Vp)
    vmem_limit = int(min(max(2 * (varying_bytes + resident_bytes), 8 << 20), 48 << 20))

    # ---- pallas_call: 1-D "parallel" grid over the batch --------------------
    kernel = functools.partial(_attr_net_kernel, gamma=float(gamma))
    grid = (B_pad // TB,)

    logits_vocab_pad = pl.pallas_call(
        kernel,
        out_shape=jax.ShapeDtypeStruct((B_pad, Vp), jnp.float32),
        grid=grid,
        in_specs=[
            pl.BlockSpec((TB, L, Dp), lambda i: (i, 0, 0)),   # attr_packed
            pl.BlockSpec((TB, L, Dp), lambda i: (i, 0, 0)),   # avgw_packed
            pl.BlockSpec((TB, Dp), lambda i: (i, 0)),         # out_embed
            pl.BlockSpec((Dp, Dp), lambda i: (0, 0)),         # w_pad (resident)
            pl.BlockSpec((1, Dp), lambda i: (0, 0)),          # bias (resident)
            pl.BlockSpec((Dp, Vp), lambda i: (0, 0)),         # vocab^T (resident)
        ],
        out_specs=pl.BlockSpec((TB, Vp), lambda i: (i, 0)),
        compiler_params=pltpu.CompilerParams(
            dimension_semantics=("parallel",),
            vmem_limit_bytes=vmem_limit,
        ),
    )(attr_packed, avgw_packed, out_embed, w_pad, bias_pad, vocab_t)

    # ---- tiny per-target gathers from the (B, V) vocab logits ---------------
    logits_vocab = logits_vocab_pad[:B]
    pos_logits = jnp.take_along_axis(logits_vocab, pos_targets, axis=1)
    neg_logits = jnp.take_along_axis(logits_vocab, neg_targets, axis=1)
    logits = jnp.concatenate([pos_logits, neg_logits], axis=-1)

    return logits, mask, new_targets


# ----------------------------------------------------------------------------
# Pure-JAX reference (mirrors the PyTorch forward) for a correctness check.
# ----------------------------------------------------------------------------
def reference_forward(
    params,
    attr_item, attr_lens_item, item_ids,
    attr_user, attr_lens_user, user_ids,
    pos_targets, pos_lens, neg_targets, neg_lens,
    *, gamma,
):
    def valid_mask(lens, seq_len):
        return jnp.arange(seq_len)[None, :] < lens[:, None]

    def avg_attr(attr, lens):
        e = params["attr_emb"][attr]
        v = valid_mask(lens, attr.shape[1]).astype(jnp.float32)
        return (e * v[..., None]).sum(1) / v.sum(1, keepdims=True)

    avg_item = avg_attr(attr_item, attr_lens_item)
    avg_user = avg_attr(attr_user, attr_lens_user)
    item_e = params["item_emb"][item_ids]
    user_e = params["user_emb"][user_ids]

    output_embed = jnp.concatenate([user_e, item_e], axis=-1)
    output_attr = jnp.concatenate([avg_user, avg_item], axis=-1)
    output_attr = output_attr @ params["attr_output_w"] + params["attr_output_b"]
    output = (1.0 - gamma) * output_embed + gamma * output_attr

    pos_e = params["out_attr_emb"][pos_targets]
    neg_e = params["out_attr_emb"][neg_targets]
    pos_logits = jnp.einsum("bld,bd->bl", pos_e, output)
    neg_logits = jnp.einsum("bld,bd->bl", neg_e, output)

    pos_mask = valid_mask(pos_lens, pos_targets.shape[1])
    neg_mask = valid_mask(neg_lens, neg_targets.shape[1])

    logits = jnp.concatenate([pos_logits, neg_logits], axis=-1)
    mask = jnp.concatenate([pos_mask, neg_mask], axis=-1)
    new_targets = (
        jnp.concatenate(
            [jnp.ones_like(pos_targets), jnp.zeros_like(neg_targets)], axis=1
        )
        * mask
    )
    return logits, mask, new_targets


# ----------------------------------------------------------------------------
if __name__ == "__main__":
    # small, deterministic configuration (multi-step grid: B=32, batch_tile=16)
    V, U, I = 64, 16, 16          # vocab_size, user_num, item_num
    E = 32                        # attr_emb_size == user_emb_size == item_emb_size
    B, L, Lp, Ln = 32, 8, 8, 8    # batch, attr seq len, pos/neg target lens
    gamma = 0.5

    key = jax.random.PRNGKey(0)
    ks = jax.random.split(key, 16)

    # deterministic "uniform(-0.1, 0.1)" parameter init (mirrors f_init_weight)
    # TODO(synk): m_attr_output is undefined in the PyTorch __init__; modeled
    # here as Linear(2E, 2E) with bias.  The TransformerEncoder (m_attn) is
    # constructed in __init__ but never used in forward(), so it is omitted.
    params = {
        "attr_emb": jax.random.uniform(ks[0], (V, E), jnp.float32, -0.1, 0.1),
        "user_emb": jax.random.uniform(ks[1], (U, E), jnp.float32, -0.1, 0.1),
        "item_emb": jax.random.uniform(ks[2], (I, E), jnp.float32, -0.1, 0.1),
        "out_attr_emb": jax.random.uniform(ks[3], (V, 2 * E), jnp.float32, -0.1, 0.1),
        "attr_output_w": jax.random.uniform(ks[4], (2 * E, 2 * E), jnp.float32, -0.1, 0.1),
        "attr_output_b": jax.random.uniform(ks[5], (2 * E,), jnp.float32, -0.1, 0.1),
    }

    # deterministic inputs (lens built so that max(lens) == padded length)
    attr_item = jax.random.randint(ks[6], (B, L), 0, V, dtype=jnp.int32)
    attr_user = jax.random.randint(ks[7], (B, L), 0, V, dtype=jnp.int32)
    attr_lens_item = jax.random.randint(ks[8], (B,), 1, L + 1, dtype=jnp.int32).at[0].set(L)
    attr_lens_user = jax.random.randint(ks[9], (B,), 1, L + 1, dtype=jnp.int32).at[0].set(L)
    item_ids = jax.random.randint(ks[10], (B,), 0, I, dtype=jnp.int32)
    user_ids = jax.random.randint(ks[11], (B,), 0, U, dtype=jnp.int32)
    pos_targets = jax.random.randint(ks[12], (B, Lp), 0, V, dtype=jnp.int32)
    neg_targets = jax.random.randint(ks[13], (B, Ln), 0, V, dtype=jnp.int32)
    pos_lens = jax.random.randint(ks[14], (B,), 1, Lp + 1, dtype=jnp.int32).at[0].set(Lp)
    neg_lens = jax.random.randint(ks[15], (B,), 1, Ln + 1, dtype=jnp.int32).at[0].set(Ln)
    attr_tf_item = jnp.ones((B, L), jnp.float32)   # unused (as in the torch forward)
    attr_tf_user = jnp.ones((B, L), jnp.float32)   # unused

    logits, mask, new_targets = attr_network_forward(
        params,
        attr_item, attr_tf_item, attr_lens_item, item_ids,
        attr_user, attr_tf_user, attr_lens_user, user_ids,
        pos_targets, pos_lens, neg_targets, neg_lens,
        gamma=gamma, batch_tile=16,   # 2 grid steps on this tiny batch
    )
    jax.block_until_ready((logits, mask, new_targets))

    ref_logits, ref_mask, ref_tgt = reference_forward(
        params,
        attr_item, attr_lens_item, item_ids,
        attr_user, attr_lens_user, user_ids,
        pos_targets, pos_lens, neg_targets, neg_lens,
        gamma=gamma,
    )

    assert logits.shape == (B, Lp + Ln)
    assert np.allclose(np.asarray(logits), np.asarray(ref_logits), atol=1e-4), "logits mismatch"
    assert np.array_equal(np.asarray(mask), np.asarray(ref_mask)), "mask mismatch"
    assert np.array_equal(np.asarray(new_targets), np.asarray(ref_tgt)), "new_targets mismatch"

    print("KERNEL_OK")
</pallas_src>

<mosaic_0001>
module attributes {stable_mosaic.version = 11 : i64} {
  func.func @_attr_net_kernel(%arg0: i32, %arg1: memref<16x8x128xf32, #tpu.memory_space<vmem>>, %arg2: memref<16x8x128xf32, #tpu.memory_space<vmem>>, %arg3: memref<16x128xf32, #tpu.memory_space<vmem>>, %arg4: memref<128x128xf32, #tpu.memory_space<vmem>>, %arg5: memref<1x128xf32, #tpu.memory_space<vmem>>, %arg6: memref<128x256xf32, #tpu.memory_space<vmem>>, %arg7: memref<16x256xf32, #tpu.memory_space<vmem>>) attributes {dimension_semantics = [#tpu.dimension_semantics<parallel>], iteration_bounds = array<i64: 2>, scalar_prefetch = 0 : i64, scratch_operands = 0 : i64, tpu.core_type = #tpu.core_type<tc>, window_params = [{transform_indices = @transform_0, window_bounds = array<i64: 16, 8, 128>}, {transform_indices = @transform_1, window_bounds = array<i64: 16, 8, 128>}, {transform_indices = @transform_2, window_bounds = array<i64: 16, 128>}, {pipeline_mode = #tpu.pipeline_mode<synchronous>, transform_indices = @transform_3, window_bounds = array<i64: 128, 128>}, {pipeline_mode = #tpu.pipeline_mode<synchronous>, transform_indices = @transform_4, window_bounds = array<i64: 1, 128>}, {pipeline_mode = #tpu.pipeline_mode<synchronous>, transform_indices = @transform_5, window_bounds = array<i64: 128, 256>}, {transform_indices = @transform_6, window_bounds = array<i64: 16, 256>}]} {
    %c0 = arith.constant 0 : index
    %c0_0 = arith.constant 0 : index
    %c0_1 = arith.constant 0 : index
    %0 = vector.load %arg1[%c0, %c0_0, %c0_1] : memref<16x8x128xf32, #tpu.memory_space<vmem>>, vector<16x8x128xf32>
    %c0_2 = arith.constant 0 : index
    %c0_3 = arith.constant 0 : index
    %c0_4 = arith.constant 0 : index
    %1 = vector.load %arg2[%c0_2, %c0_3, %c0_4] : memref<16x8x128xf32, #tpu.memory_space<vmem>>, vector<16x8x128xf32>
    %2 = arith.mulf %0, %1 : vector<16x8x128xf32>
    %cst = arith.constant dense<0.000000e+00> : vector<16x128xf32>
    %3 = vector.multi_reduction <add>, %2, %cst [1] : vector<16x8x128xf32> to vector<16x128xf32>
    %c0_5 = arith.constant 0 : index
    %c0_6 = arith.constant 0 : index
    %4 = vector.load %arg4[%c0_5, %c0_6] : memref<128x128xf32, #tpu.memory_space<vmem>>, vector<128x128xf32>
    %cst_7 = arith.constant dense<0.000000e+00> : vector<16x128xf32>
    %5 = tpu.matmul %3, %4, %cst_7 {dimension_numbers = #tpu.dot_dimension_numbers<[1], [0], [0], [1], [0, 0, 1, 1], [], []>} : vector<16x128xf32>, vector<128x128xf32>, vector<16x128xf32> -> vector<16x128xf32>
    %c0_8 = arith.constant 0 : index
    %c0_9 = arith.constant 0 : index
    %6 = vector.load %arg5[%c0_8, %c0_9] : memref<1x128xf32, #tpu.memory_space<vmem>>, vector<1x128xf32>
    %7 = vector.broadcast %6 : vector<1x128xf32> to vector<16x128xf32>
    %8 = arith.addf %5, %7 : vector<16x128xf32>
    %c0_10 = arith.constant 0 : index
    %c0_11 = arith.constant 0 : index
    %9 = vector.load %arg3[%c0_10, %c0_11] : memref<16x128xf32, #tpu.memory_space<vmem>>, vector<16x128xf32>
    %cst_12 = arith.constant 5.000000e-01 : f32
    %10 = vector.broadcast %cst_12 : f32 to vector<16x128xf32>
    %11 = arith.mulf %10, %9 : vector<16x128xf32>
    %cst_13 = arith.constant 5.000000e-01 : f32
    %12 = vector.broadcast %cst_13 : f32 to vector<16x128xf32>
    %13 = arith.mulf %12, %8 : vector<16x128xf32>
    %14 = arith.addf %11, %13 : vector<16x128xf32>
    %c0_14 = arith.constant 0 : index
    %c0_15 = arith.constant 0 : index
    %15 = vector.load %arg6[%c0_14, %c0_15] : memref<128x256xf32, #tpu.memory_space<vmem>>, vector<128x256xf32>
    %cst_16 = arith.constant dense<0.000000e+00> : vector<16x256xf32>
    %16 = tpu.matmul %14, %15, %cst_16 {dimension_numbers = #tpu.dot_dimension_numbers<[1], [0], [0], [1], [0, 0, 1, 1], [], []>} : vector<16x128xf32>, vector<128x256xf32>, vector<16x256xf32> -> vector<16x256xf32>
    %c0_17 = arith.constant 0 : index
    %c0_18 = arith.constant 0 : index
    %17 = vector.load %arg7[%c0_17, %c0_18] : memref<16x256xf32, #tpu.memory_space<vmem>>, vector<16x256xf32>
    tpu.vector_store %arg7[%c0_17, %c0_18], %16 {strides = array<i32>} : memref<16x256xf32, #tpu.memory_space<vmem>>, vector<16x256xf32>,
    return
  }
  func.func @transform_0(%arg0: i32) -> (i32, i32, i32) {
    %c0_i32 = arith.constant 0 : i32
    %c0_i32_0 = arith.constant 0 : i32
    %c0_i32_1 = arith.constant 0 : i32
    return %arg0, %c0_i32, %c0_i32_0 : i32, i32, i32
  }
  func.func @transform_1(%arg0: i32) -> (i32, i32, i32) {
    %c0_i32 = arith.constant 0 : i32
    %c0_i32_0 = arith.constant 0 : i32
    %c0_i32_1 = arith.constant 0 : i32
    return %arg0, %c0_i32, %c0_i32_0 : i32, i32, i32
  }
  func.func @transform_2(%arg0: i32) -> (i32, i32) {
    %c0_i32 = arith.constant 0 : i32
    %c0_i32_0 = arith.constant 0 : i32
    return %arg0, %c0_i32 : i32, i32
  }
  func.func @transform_3(%arg0: i32) -> (i32, i32) {
    %c0_i32 = arith.constant 0 : i32
    %c0_i32_0 = arith.constant 0 : i32
    %c0_i32_1 = arith.constant 0 : i32
    return %c0_i32, %c0_i32_0 : i32, i32
  }
  func.func @transform_4(%arg0: i32) -> (i32, i32) {
    %c0_i32 = arith.constant 0 : i32
    %c0_i32_0 = arith.constant 0 : i32
    %c0_i32_1 = arith.constant 0 : i32
    return %c0_i32, %c0_i32_0 : i32, i32
  }
  func.func @transform_5(%arg0: i32) -> (i32, i32) {
    %c0_i32 = arith.constant 0 : i32
    %c0_i32_0 = arith.constant 0 : i32
    %c0_i32_1 = arith.constant 0 : i32
    return %c0_i32, %c0_i32_0 : i32, i32
  }
  func.func @transform_6(%arg0: i32) -> (i32, i32) {
    %c0_i32 = arith.constant 0 : i32
    %c0_i32_0 = arith.constant 0 : i32
    return %arg0, %c0_i32 : i32, i32
  }
}

</mosaic_0001>

<llo_original>
// kernel: tpu_custom_call.1
$region0: #{tpu_custom_call.1}
  #allocation0 [shape = 'u32[]', space=smem, size = 0x4, offset = 0x4, fixed_abs, tag = 'smem constant byte address 0x4 - core index']
  #allocation1 [shape = 'u32[144,128]{1,0:T(1,128)}', space=vmem, size = 0x12000, scoped, tag = 'internal scratch']
  %s0 = inlined_call_operand.hbm [shape: f32[32,8,128], index: 0, kind: input, shape index: {}]
  %s1 = inlined_call_operand.hbm [shape: f32[32,8,128], index: 1, kind: input, shape index: {}]
  %s2 = inlined_call_operand.hbm [shape: f32[32,128], index: 2, kind: input, shape index: {}]
  %s3 = inlined_call_operand.hbm [shape: f32[128,128], index: 3, kind: input, shape index: {}]
  %s4 = inlined_call_operand.vmem [shape: f32[1,128], index: 4, kind: input, shape index: {}]
  %s5 = inlined_call_operand.hbm [shape: f32[128,256], index: 5, kind: input, shape index: {}]
  %s6 = inlined_call_operand.hbm [shape: f32[32,256], index: 6, kind: output, shape index: {}]
  %s7 = sld [smem:[#allocation0]]
  $region77: #{tpu_custom_call.1} parent=0
    _
  %s9 = ssub.s32 1, %s7
  %s10 = scalar_select 0, %s9, %s7
  $region1: #{tpu_custom_call.1} parent=0
    #allocation2 [shape = 'u8[131072]{0}', space=vmem, size = 0x20000, scoped, tag = 'input window, operand 0']
    #allocation3 [shape = 's32[2]{0}', space=sflag, size = 0x8, scoped, tag = 'scoped memory for tpu_custom_call.1']
    #allocation4 [shape = 's32[2]{0}', space=sflag, size = 0x8, scoped, tag = 'scoped memory for tpu_custom_call.1']
    #allocation5 [shape = 'u8[131072]{0}', space=vmem, size = 0x20000, scoped, tag = 'input window, operand 1']
    #allocation6 [shape = 's32[2]{0}', space=sflag, size = 0x8, scoped, tag = 'scoped memory for tpu_custom_call.1']
    #allocation7 [shape = 'u8[16384]{0}', space=vmem, size = 0x4000, scoped, tag = 'input window, operand 2']
    #allocation8 [shape = 'u8[65536]{0}', space=vmem, size = 0x10000, scoped, tag = 'input window, operand 3, single buffered']
    #allocation9 [shape = 's32[1]{0}', space=sflag, size = 0x4, scoped, tag = 'scoped memory for tpu_custom_call.1']
    #allocation10 [shape = 'u8[131072]{0}', space=vmem, size = 0x20000, scoped, tag = 'input window, operand 5, single buffered']
    #allocation11 [shape = 'u8[32768]{0}', space=vmem, size = 0x8000, scoped, tag = 'output window, operand 0']
    %11 = vsyncpa [#allocation3], 0
    %s12 = scalar_lea.sflag [#allocation3], 1
    %13 = vsyncpa %s12, 0
    %14 = vsyncpa [#allocation6], 0
    %s15 = scalar_lea.sflag [#allocation6], 1
    %16 = vsyncpa %s15, 0
    %17 = vsyncpa [#allocation9], 0
    %18 = vsyncpa [#allocation4], 0
    %s19 = scalar_lea.sflag [#allocation4], 1
    %20 = vsyncpa %s19, 0
    loop: start=0, step=1, limit=4
    $region2: #{tpu_custom_call.1} parent=1 // loop_pre_header
      _
    $region3: #{tpu_custom_call.1} parent=1 // loop_header
      %s22 = sphi 0, %s26
      %p23 = scmp.ge.s32.totalorder %s22, 4
      %s32 = sphi 0, %s34
      %s35 = sphi 0, %s32
      %s36 = sphi 0, %s35
      %s52 = sphi 0, %s36
      %s58 = sphi 0, %s60
      %s61 = sphi 0, %s58
      %s62 = sphi 0, %s61
      %s78 = sphi 0, %s62
      %s84 = sphi 0, %s86
      %s87 = sphi 0, %s84
      %s88 = sphi 0, %s87
      %s104 = sphi 0, %s88
      %s108 = sphi 0, %s108
      %s110 = sphi 0, %s108
      %s111 = sphi 0, %s110
      %s125 = sphi 0, %s111
      %s129 = sphi 0, %s129
      %s131 = sphi 0, %s129
      %s132 = sphi 0, %s131
      %s146 = sphi 0, %s132
      %s150 = sphi 0, %s150
      %s152 = sphi 0, %s150
      %s153 = sphi 0, %s152
      %s167 = sphi 0, %s153
      %s173 = sphi 0, %s175
      %s176 = sphi 0, %s173
      %s177 = sphi 0, %s176
      %s193 = sphi 0, %s177
    $region4: #{tpu_custom_call.1} parent=1 // loop_header_branch
      %25 = sbr.rel (%p23) target = $region8
    $region5: #{tpu_custom_call.1} parent=1 // loop_body
      %s27 = ssub.s32 %s22, 1
      %s28 = ssub.s32 %s22, 2
      %s29 = sadd.s32 %s22, 1
      %s30 = ssub.s32 %s22, %s29
      %p31 = scmp.eq.s32.totalorder %s30, 0
      %s33 = sadd.s32 %s32, 1
      %s34 = scalar_select %p31, %s32, %s33
      %p37 = pneg %p31
      %p38 = scmp.eq.s32.totalorder %s22, 1
      %p39 = por %p37, %p38
      %p40 = scmp.ne.s32.totalorder %s32, %s35
      %p41 = scmp.eq.s32.totalorder %s22, 0
      %p42 = por %p40, %p41
      %p43 = scmp.ne.s32.totalorder %s32, %s35
      %p44 = scmp.eq.s32.totalorder %s27, 1
      %p45 = por %p43, %p44
      %p46 = scmp.ne.s32.totalorder %s35, %s36
      %p47 = scmp.eq.s32.totalorder %s27, 0
      %p48 = por %p46, %p47
      %p49 = scmp.ne.s32.totalorder %s35, %s36
      %p50 = scmp.eq.s32.totalorder %s28, 1
      %p51 = por %p49, %p50
      %p53 = scmp.ne.s32.totalorder %s36, %s52
      %p54 = scmp.eq.s32.totalorder %s28, 0
      %p55 = por %p53, %p54
      %s56 = ssub.s32 %s22, %s29
      %p57 = scmp.eq.s32.totalorder %s56, 0
      %s59 = sadd.s32 %s58, 1
      %s60 = scalar_select %p57, %s58, %s59
      %p63 = pneg %p57
      %p64 = scmp.eq.s32.totalorder %s22, 1
      %p65 = por %p63, %p64
      %p66 = scmp.ne.s32.totalorder %s58, %s61
      %p67 = scmp.eq.s32.totalorder %s22, 0
      %p68 = por %p66, %p67
      %p69 = scmp.ne.s32.totalorder %s58, %s61
      %p70 = scmp.eq.s32.totalorder %s27, 1
      %p71 = por %p69, %p70
      %p72 = scmp.ne.s32.totalorder %s61, %s62
      %p73 = scmp.eq.s32.totalorder %s27, 0
      %p74 = por %p72, %p73
      %p75 = scmp.ne.s32.totalorder %s61, %s62
      %p76 = scmp.eq.s32.totalorder %s28, 1
      %p77 = por %p75, %p76
      %p79 = scmp.ne.s32.totalorder %s62, %s78
      %p80 = scmp.eq.s32.totalorder %s28, 0
      %p81 = por %p79, %p80
      %s82 = ssub.s32 %s22, %s29
      %p83 = scmp.eq.s32.totalorder %s82, 0
      %s85 = sadd.s32 %s84, 1
      %s86 = scalar_select %p83, %s84, %s85
      %p89 = pneg %p83
      %p90 = scmp.eq.s32.totalorder %s22, 1
      %p91 = por %p89, %p90
      %p92 = scmp.ne.s32.totalorder %s84, %s87
      %p93 = scmp.eq.s32.totalorder %s22, 0
      %p94 = por %p92, %p93
      %p95 = scmp.ne.s32.totalorder %s84, %s87
      %p96 = scmp.eq.s32.totalorder %s27, 1
      %p97 = por %p95, %p96
      %p98 = scmp.ne.s32.totalorder %s87, %s88
      %p99 = scmp.eq.s32.totalorder %s27, 0
      %p100 = por %p98, %p99
      %p101 = scmp.ne.s32.totalorder %s87, %s88
      %p102 = scmp.eq.s32.totalorder %s28, 1
      %p103 = por %p101, %p102
      %p105 = scmp.ne.s32.totalorder %s88, %s104
      %p106 = scmp.eq.s32.totalorder %s28, 0
      %p107 = por %p105, %p106
      %s109 = sadd.s32 %s108, 1
      %p112 = scmp.eq.s32.totalorder %s22, 1
      %p113 = scmp.ne.s32.totalorder %s108, %s110
      %p114 = scmp.eq.s32.totalorder %s22, 0
      %p115 = por %p113, %p114
      %p116 = scmp.ne.s32.totalorder %s108, %s110
      %p117 = scmp.eq.s32.totalorder %s27, 1
      %p118 = por %p116, %p117
      %p119 = scmp.ne.s32.totalorder %s110, %s111
      %p120 = scmp.eq.s32.totalorder %s27, 0
      %p121 = por %p119, %p120
      %p122 = scmp.ne.s32.totalorder %s110, %s111
      %p123 = scmp.eq.s32.totalorder %s28, 1
      %p124 = por %p122, %p123
      %p126 = scmp.ne.s32.totalorder %s111, %s125
      %p127 = scmp.eq.s32.totalorder %s28, 0
      %p128 = por %p126, %p127
      %s130 = sadd.s32 %s129, 1
      %p133 = scmp.eq.s32.totalorder %s22, 1
      %p134 = scmp.ne.s32.totalorder %s129, %s131
      %p135 = scmp.eq.s32.totalorder %s22, 0
      %p136 = por %p134, %p135
      %p137 = scmp.ne.s32.totalorder %s129, %s131
      %p138 = scmp.eq.s32.totalorder %s27, 1
      %p139 = por %p137, %p138
      %p140 = scmp.ne.s32.totalorder %s131, %s132
      %p141 = scmp.eq.s32.totalorder %s27, 0
      %p142 = por %p140, %p141
      %p143 = scmp.ne.s32.totalorder %s131, %s132
      %p144 = scmp.eq.s32.totalorder %s28, 1
      %p145 = por %p143, %p144
      %p147 = scmp.ne.s32.totalorder %s132, %s146
      %p148 = scmp.eq.s32.totalorder %s28, 0
      %p149 = por %p147, %p148
      %s151 = sadd.s32 %s150, 1
      %p154 = scmp.eq.s32.totalorder %s22, 1
      %p155 = scmp.ne.s32.totalorder %s150, %s152
      %p156 = scmp.eq.s32.totalorder %s22, 0
      %p157 = por %p155, %p156
      %p158 = scmp.ne.s32.totalorder %s150, %s152
      %p159 = scmp.eq.s32.totalorder %s27, 1
      %p160 = por %p158, %p159
      %p161 = scmp.ne.s32.totalorder %s152, %s153
      %p162 = scmp.eq.s32.totalorder %s27, 0
      %p163 = por %p161, %p162
      %p164 = scmp.ne.s32.totalorder %s152, %s153
      %p165 = scmp.eq.s32.totalorder %s28, 1
      %p166 = por %p164, %p165
      %p168 = scmp.ne.s32.totalorder %s153, %s167
      %p169 = scmp.eq.s32.totalorder %s28, 0
      %p170 = por %p168, %p169
      %s171 = ssub.s32 %s22, %s29
      %p172 = scmp.eq.s32.totalorder %s171, 0
      %s174 = sadd.s32 %s173, 1
      %s175 = scalar_select %p172, %s173, %s174
      %p178 = pneg %p172
      %p179 = scmp.eq.s32.totalorder %s22, 1
      %p180 = por %p178, %p179
      %p181 = scmp.ne.s32.totalorder %s173, %s176
      %p182 = scmp.eq.s32.totalorder %s22, 0
      %p183 = por %p181, %p182
      %p184 = scmp.ne.s32.totalorder %s173, %s176
      %p185 = scmp.eq.s32.totalorder %s27, 1
      %p186 = por %p184, %p185
      %p187 = scmp.ne.s32.totalorder %s176, %s177
      %p188 = scmp.eq.s32.totalorder %s27, 0
      %p189 = por %p187, %p188
      %p190 = scmp.ne.s32.totalorder %s176, %s177
      %p191 = scmp.eq.s32.totalorder %s28, 1
      %p192 = por %p190, %p191
      %p194 = scmp.ne.s32.totalorder %s177, %s193
      %p195 = scmp.eq.s32.totalorder %s28, 0
      %p196 = por %p194, %p195
      %p197 = scmp.le.s32.totalorder 1, %s22
      %p198 = scmp.lt.s32.totalorder %s22, 3
      %p199 = pnand %p197, %p198
      %p200 = pneg %p199
      // Predicated region
      $region9: #{tpu_custom_call.1} parent=5 // pred_check
        _
      $region10: #{tpu_custom_call.1} parent=5 // pred_check_branch
        %202 = sbr.rel (%p199) target = $region12
      $region11: #{tpu_custom_call.1} parent=5 // pred_region
        %s203 = ssub.s32 %s22, 1
        // Predicated region
        $region13: #{tpu_custom_call.1} parent=11 // pred_check
          %p204 = pneg %p121
        $region14: #{tpu_custom_call.1} parent=11 // pred_check_branch
          %206 = sbr.rel (%p204) target = $region16
        $region15: #{tpu_custom_call.1} parent=11 // pred_region
          %s208 = ssub.s32 2048, 2048
          %209 = vsyncadd [#allocation9], %s208
          %s210 = sshll.u32 [#allocation8], 4
          %s211 = int_to_ptr.vmem [resolvable:$true] %s210
          %216 = dma.hbm_to_vmem [thread:$0]  %s3, 2048, %s211, [#allocation9], 128, 128, 8
        $region16: #{tpu_custom_call.1} parent=11 // pred_fallthru
          _
        // Predicated region
        $region17: #{tpu_custom_call.1} parent=11 // pred_check
          %p217 = pneg %p142
        $region18: #{tpu_custom_call.1} parent=11 // pred_check_branch
          %219 = sbr.rel (%p217) target = $region20
        $region19: #{tpu_custom_call.1} parent=11 // pred_region
          _
        $region20: #{tpu_custom_call.1} parent=11 // pred_fallthru
          _
        // Predicated region
        $region21: #{tpu_custom_call.1} parent=11 // pred_check
          %p220 = pneg %p163
        $region22: #{tpu_custom_call.1} parent=11 // pred_check_branch
          %222 = sbr.rel (%p220) target = $region24
        $region23: #{tpu_custom_call.1} parent=11 // pred_region
          %s224 = ssub.s32 4096, 4096
          %225 = vsyncadd [#allocation9], %s224
          %s226 = sshll.u32 [#allocation10], 4
          %s227 = int_to_ptr.vmem [resolvable:$true] %s226
          %232 = dma.hbm_to_vmem [thread:$0]  %s5, 4096, %s227, [#allocation9], 256, 256, 16
        $region24: #{tpu_custom_call.1} parent=11 // pred_fallthru
          _
      $region12: #{tpu_custom_call.1} parent=5 // pred_fallthru
        _
      %p233 = scmp.lt.s32.totalorder %s22, 2
      // Predicated region
      $region25: #{tpu_custom_call.1} parent=5 // pred_check
        %p234 = pneg %p233
      $region26: #{tpu_custom_call.1} parent=5 // pred_check_branch
        %236 = sbr.rel (%p234) target = $region28
      $region27: #{tpu_custom_call.1} parent=5 // pred_region
        // Predicated region
        $region29: #{tpu_custom_call.1} parent=27 // pred_check
          %p237 = pneg %p42
        $region30: #{tpu_custom_call.1} parent=27 // pred_check_branch
          %239 = sbr.rel (%p237) target = $region32
        $region31: #{tpu_custom_call.1} parent=27 // pred_region
          %s240 = sand.u32 %s32, 1
          %s241 = scalar_lea.sflag [#allocation3], %s240
          %s242 = sand.u32 %s32, 1
          %s243 = smul.addr %s242, 128
          %s244 = scalar_lea.vmem [#allocation2], %s243
          %s245 = smul.u32 16, %s22
          %s247 = ssub.s32 2048, 2048
          %248 = vsyncadd %s241, %s247
          %s249 = smul.addr %s245, 128
          %s250 = scalar_lea.hbm %s0, %s249
          %s251 = sshll.u32 %s244, 4
          %s252 = int_to_ptr.vmem [resolvable:$true] %s251
          %257 = dma.hbm_to_vmem [thread:$0]  %s250, 2048, %s252, %s241, 128, 128, 8
        $region32: #{tpu_custom_call.1} parent=27 // pred_fallthru
          _
        // Predicated region
        $region33: #{tpu_custom_call.1} parent=27 // pred_check
          %p258 = pneg %p68
        $region34: #{tpu_custom_call.1} parent=27 // pred_check_branch
          %260 = sbr.rel (%p258) target = $region36
        $region35: #{tpu_custom_call.1} parent=27 // pred_region
          %s261 = sand.u32 %s22, 1
          %s262 = scalar_lea.sflag [#allocation6], %s261
          %s263 = sand.u32 %s58, 1
          %s264 = smul.addr %s263, 128
          %s265 = scalar_lea.vmem [#allocation5], %s264
          %s266 = smul.u32 16, %s22
          %s268 = ssub.s32 2048, 2048
          %269 = vsyncadd %s262, %s268
          %s270 = smul.addr %s266, 128
          %s271 = scalar_lea.hbm %s1, %s270
          %s272 = sshll.u32 %s265, 4
          %s273 = int_to_ptr.vmem [resolvable:$true] %s272
          %278 = dma.hbm_to_vmem [thread:$0]  %s271, 2048, %s273, %s262, 128, 128, 8
        $region36: #{tpu_custom_call.1} parent=27 // pred_fallthru
          _
        // Predicated region
        $region37: #{tpu_custom_call.1} parent=27 // pred_check
          %p279 = pneg %p94
        $region38: #{tpu_custom_call.1} parent=27 // pred_check_branch
          %281 = sbr.rel (%p279) target = $region40
        $region39: #{tpu_custom_call.1} parent=27 // pred_region
          %s282 = sand.u32 %s22, 1
          %s283 = scalar_lea.sflag [#allocation6], %s282
          %s284 = sand.u32 %s84, 1
          %s285 = smul.addr %s284, 16
          %s286 = scalar_lea.vmem [#allocation7], %s285
          %s287 = smul.u32 2, %s22
          %s289 = ssub.s32 256, 256
          %290 = vsyncadd %s283, %s289
          %s291 = smul.addr %s287, 128
          %s292 = scalar_lea.hbm %s2, %s291
          %s293 = sshll.u32 %s286, 4
          %s294 = int_to_ptr.vmem [resolvable:$true] %s293
          %299 = dma.hbm_to_vmem [thread:$0]  %s292, 256, %s294, %s283, 128, 128, 8
        $region40: #{tpu_custom_call.1} parent=27 // pred_fallthru
          _
      $region28: #{tpu_custom_call.1} parent=5 // pred_fallthru
        _
      %p300 = scmp.le.s32.totalorder 1, %s22
      %p301 = scmp.lt.s32.totalorder %s22, 3
      %p302 = pnand %p300, %p301
      %p303 = pneg %p302
      // Predicated region
      $region41: #{tpu_custom_call.1} parent=5 // pred_check
        _
      $region42: #{tpu_custom_call.1} parent=5 // pred_check_branch
        %305 = sbr.rel (%p302) target = $region44
      $region43: #{tpu_custom_call.1} parent=5 // pred_region
        %s306 = ssub.s32 %s22, 1
        %s307 = sand.u32 %s35, 1
        %s308 = scalar_lea.sflag [#allocation3], %s307
        %s309 = sand.u32 %s35, 1
        %s310 = smul.addr %s309, 128
        %s311 = scalar_lea.vmem [#allocation2], %s310
        // Predicated region
        $region45: #{tpu_custom_call.1} parent=43 // pred_check
          %p312 = pneg %p48
        $region46: #{tpu_custom_call.1} parent=43 // pred_check_branch
          %314 = sbr.rel (%p312) target = $region48
        $region47: #{tpu_custom_call.1} parent=43 // pred_region
          %315 = dma.done %s308, 2048
        $region48: #{tpu_custom_call.1} parent=43 // pred_fallthru
          _
        %s316 = sand.u32 %s27, 1
        %s317 = scalar_lea.sflag [#allocation6], %s316
        %s318 = sand.u32 %s61, 1
        %s319 = smul.addr %s318, 128
        %s320 = scalar_lea.vmem [#allocation5], %s319
        // Predicated region
        $region49: #{tpu_custom_call.1} parent=43 // pred_check
          %p321 = pneg %p74
        $region50: #{tpu_custom_call.1} parent=43 // pred_check_branch
          %323 = sbr.rel (%p321) target = $region52
        $region51: #{tpu_custom_call.1} parent=43 // pred_region
          %324 = dma.done %s317, 2048
        $region52: #{tpu_custom_call.1} parent=43 // pred_fallthru
          _
        %s325 = sand.u32 %s27, 1
        %s326 = scalar_lea.sflag [#allocation6], %s325
        %s327 = sand.u32 %s87, 1
        %s328 = smul.addr %s327, 16
        %s329 = scalar_lea.vmem [#allocation7], %s328
        // Predicated region
        $region53: #{tpu_custom_call.1} parent=43 // pred_check
          %p330 = pneg %p100
        $region54: #{tpu_custom_call.1} parent=43 // pred_check_branch
          %332 = sbr.rel (%p330) target = $region56
        $region55: #{tpu_custom_call.1} parent=43 // pred_region
          %333 = dma.done %s326, 256
        $region56: #{tpu_custom_call.1} parent=43 // pred_fallthru
          _
        // Predicated region
        $region57: #{tpu_custom_call.1} parent=43 // pred_check
          %p334 = pneg %p121
        $region58: #{tpu_custom_call.1} parent=43 // pred_check_branch
          %336 = sbr.rel (%p334) target = $region60
        $region59: #{tpu_custom_call.1} parent=43 // pred_region
          %337 = dma.done [#allocation9], 2048
        $region60: #{tpu_custom_call.1} parent=43 // pred_fallthru
          _
        // Predicated region
        $region61: #{tpu_custom_call.1} parent=43 // pred_check
          %p338 = pneg %p163
        $region62: #{tpu_custom_call.1} parent=43 // pred_check_branch
          %340 = sbr.rel (%p338) target = $region64
        $region63: #{tpu_custom_call.1} parent=43 // pred_region
          %341 = dma.done [#allocation9], 4096
        $region64: #{tpu_custom_call.1} parent=43 // pred_fallthru
          _
        %s342 = sand.u32 %s35, 1
        %s343 = scalar_lea.sflag [#allocation3], %s342
        %s344 = sand.u32 %s35, 1
        %s345 = smul.addr %s344, 128
        %s346 = scalar_lea.vmem [#allocation2], %s345
        %p347 = pneg %p48
        %p348 = pneg %p45
        %s349 = sand.u32 %s27, 1
        %s350 = scalar_lea.sflag [#allocation6], %s349
        %s351 = sand.u32 %s61, 1
        %s352 = smul.addr %s351, 128
        %s353 = scalar_lea.vmem [#allocation5], %s352
        %p354 = pneg %p74
        %p355 = pneg %p71
        %s356 = sand.u32 %s27, 1
        %s357 = scalar_lea.sflag [#allocation6], %s356
        %s358 = sand.u32 %s87, 1
        %s359 = smul.addr %s358, 16
        %s360 = scalar_lea.vmem [#allocation7], %s359
        %p361 = pneg %p100
        %p362 = pneg %p97
        %p363 = pneg %p121
        %p364 = pneg %p118
        %p365 = pneg %p142
        %p366 = pneg %p139
        %p367 = pneg %p163
        %p368 = pneg %p160
        %p369 = pneg %p189
        %p370 = pneg %p186
        %s371 = sand.u32 %s176, 1
        %s372 = scalar_lea.sflag [#allocation4], %s371
        %s373 = sand.u32 %s176, 1
        %s374 = smul.addr %s373, 32
        %s375 = scalar_lea.vmem [#allocation11], %s374
        %s376 = smul.u32 16, %s27
        %s377 = smul.u32 16, %s27
        %s378 = smul.u32 2, %s27
        %s379 = smul.u32 2, %s27
        %v380 = vld [vmem:[%s311] sm:$0xff]
        %v381 = vld [vmem:[%s311 + $0x8] sm:$0xff]
        %v382 = vld [vmem:[%s311 + $0x10] sm:$0xff]
        %v383 = vld [vmem:[%s311 + $0x18] sm:$0xff]
        %v384 = vld [vmem:[%s311 + $0x20] sm:$0xff]
        %v385 = vld [vmem:[%s311 + $0x28] sm:$0xff]
        %v386 = vld [vmem:[%s311 + $0x30] sm:$0xff]
        %v387 = vld [vmem:[%s311 + $0x38] sm:$0xff]
        %v388 = vld [vmem:[%s311 + $0x40] sm:$0xff]
        %v389 = vld [vmem:[%s311 + $0x48] sm:$0xff]
        %v390 = vld [vmem:[%s311 + $0x50] sm:$0xff]
        %v391 = vld [vmem:[%s311 + $0x58] sm:$0xff]
        %v392 = vld [vmem:[%s311 + $0x60] sm:$0xff]
        %v393 = vld [vmem:[%s311 + $0x68] sm:$0xff]
        %v394 = vld [vmem:[%s311 + $0x70] sm:$0xff]
        %v395 = vld [vmem:[%s311 + $0x78] sm:$0xff]
        %v396 = vld [vmem:[%s320] sm:$0xff]
        %v397 = vld [vmem:[%s320 + $0x8] sm:$0xff]
        %v398 = vld [vmem:[%s320 + $0x10] sm:$0xff]
        %v399 = vld [vmem:[%s320 + $0x18] sm:$0xff]
        %v400 = vld [vmem:[%s320 + $0x20] sm:$0xff]
        %v401 = vld [vmem:[%s320 + $0x28] sm:$0xff]
        %v402 = vld [vmem:[%s320 + $0x30] sm:$0xff]
        %v403 = vld [vmem:[%s320 + $0x38] sm:$0xff]
        %v404 = vld [vmem:[%s320 + $0x40] sm:$0xff]
        %v405 = vld [vmem:[%s320 + $0x48] sm:$0xff]
        %v406 = vld [vmem:[%s320 + $0x50] sm:$0xff]
        %v407 = vld [vmem:[%s320 + $0x58] sm:$0xff]
        %v408 = vld [vmem:[%s320 + $0x60] sm:$0xff]
        %v409 = vld [vmem:[%s320 + $0x68] sm:$0xff]
        %v410 = vld [vmem:[%s320 + $0x70] sm:$0xff]
        %v411 = vld [vmem:[%s320 + $0x78] sm:$0xff]
        %v412 = vmul.f32 %v380, %v396
        %v413 = vmul.f32 %v381, %v397
        %v414 = vmul.f32 %v382, %v398
        %v415 = vmul.f32 %v383, %v399
        %v416 = vmul.f32 %v384, %v400
        %v417 = vmul.f32 %v385, %v401
        %v418 = vmul.f32 %v386, %v402
        %v419 = vmul.f32 %v387, %v403
        %v420 = vmul.f32 %v388, %v404
        %v421 = vmul.f32 %v389, %v405
        %v422 = vmul.f32 %v390, %v406
        %v423 = vmul.f32 %v391, %v407
        %v424 = vmul.f32 %v392, %v408
        %v425 = vmul.f32 %v393, %v409
        %v426 = vmul.f32 %v394, %v410
        %v427 = vmul.f32 %v395, %v411
        %v428 = vrot.slane %v412, 4
        %v429 = vadd.f32 %v412, %v428
        %v430 = vrot.slane %v429, 2
        %v431 = vadd.f32 %v429, %v430
        %v432 = vrot.slane %v431, 1
        %v433 = vadd.f32 %v431, %v432
        %v434 = vrot.slane %v413, 4
        %v435 = vadd.f32 %v413, %v434
        %v436 = vrot.slane %v435, 2
        %v437 = vadd.f32 %v435, %v436
        %v438 = vrot.slane %v437, 1
        %v439 = vadd.f32 %v437, %v438
        %v440 = vrot.slane %v414, 4
        %v441 = vadd.f32 %v414, %v440
        %v442 = vrot.slane %v441, 2
        %v443 = vadd.f32 %v441, %v442
        %v444 = vrot.slane %v443, 1
        %v445 = vadd.f32 %v443, %v444
        %v446 = vrot.slane %v415, 4
        %v447 = vadd.f32 %v415, %v446
        %v448 = vrot.slane %v447, 2
        %v449 = vadd.f32 %v447, %v448
        %v450 = vrot.slane %v449, 1
        %v451 = vadd.f32 %v449, %v450
        %v452 = vrot.slane %v416, 4
        %v453 = vadd.f32 %v416, %v452
        %v454 = vrot.slane %v453, 2
        %v455 = vadd.f32 %v453, %v454
        %v456 = vrot.slane %v455, 1
        %v457 = vadd.f32 %v455, %v456
        %v458 = vrot.slane %v417, 4
        %v459 = vadd.f32 %v417, %v458
        %v460 = vrot.slane %v459, 2
        %v461 = vadd.f32 %v459, %v460
        %v462 = vrot.slane %v461, 1
        %v463 = vadd.f32 %v461, %v462
        %v464 = vrot.slane %v418, 4
        %v465 = vadd.f32 %v418, %v464
        %v466 = vrot.slane %v465, 2
        %v467 = vadd.f32 %v465, %v466
        %v468 = vrot.slane %v467, 1
        %v469 = vadd.f32 %v467, %v468
        %v470 = vrot.slane %v419, 4
        %v471 = vadd.f32 %v419, %v470
        %v472 = vrot.slane %v471, 2
        %v473 = vadd.f32 %v471, %v472
        %v474 = vrot.slane %v473, 1
        %v475 = vadd.f32 %v473, %v474
        %v476 = vrot.slane %v420, 4
        %v477 = vadd.f32 %v420, %v476
        %v478 = vrot.slane %v477, 2
        %v479 = vadd.f32 %v477, %v478
        %v480 = vrot.slane %v479, 1
        %v481 = vadd.f32 %v479, %v480
        %v482 = vrot.slane %v421, 4
        %v483 = vadd.f32 %v421, %v482
        %v484 = vrot.slane %v483, 2
        %v485 = vadd.f32 %v483, %v484
        %v486 = vrot.slane %v485, 1
        %v487 = vadd.f32 %v485, %v486
        %v488 = vrot.slane %v422, 4
        %v489 = vadd.f32 %v422, %v488
        %v490 = vrot.slane %v489, 2
        %v491 = vadd.f32 %v489, %v490
        %v492 = vrot.slane %v491, 1
        %v493 = vadd.f32 %v491, %v492
        %v494 = vrot.slane %v423, 4
        %v495 = vadd.f32 %v423, %v494
        %v496 = vrot.slane %v495, 2
        %v497 = vadd.f32 %v495, %v496
        %v498 = vrot.slane %v497, 1
        %v499 = vadd.f32 %v497, %v498
        %v500 = vrot.slane %v424, 4
        %v501 = vadd.f32 %v424, %v500
        %v502 = vrot.slane %v501, 2
        %v503 = vadd.f32 %v501, %v502
        %v504 = vrot.slane %v503, 1
        %v505 = vadd.f32 %v503, %v504
        %v506 = vrot.slane %v425, 4
        %v507 = vadd.f32 %v425, %v506
        %v508 = vrot.slane %v507, 2
        %v509 = vadd.f32 %v507, %v508
        %v510 = vrot.slane %v509, 1
        %v511 = vadd.f32 %v509, %v510
        %v512 = vrot.slane %v426, 4
        %v513 = vadd.f32 %v426, %v512
        %v514 = vrot.slane %v513, 2
        %v515 = vadd.f32 %v513, %v514
        %v516 = vrot.slane %v515, 1
        %v517 = vadd.f32 %v515, %v516
        %v518 = vrot.slane %v427, 4
        %v519 = vadd.f32 %v427, %v518
        %v520 = vrot.slane %v519, 2
        %v521 = vadd.f32 %v519, %v520
        %v522 = vrot.slane %v521, 1
        %v523 = vadd.f32 %v521, %v522
        %v524 = vld [vmem:[#allocation8] sm:$0xff]
        %v525 = vld [vmem:[#allocation8 + $0x8] sm:$0xff]
        %v526 = vld [vmem:[#allocation8 + $0x10] sm:$0xff]
        %v527 = vld [vmem:[#allocation8 + $0x18] sm:$0xff]
        %v528 = vld [vmem:[#allocation8 + $0x20] sm:$0xff]
        %v529 = vld [vmem:[#allocation8 + $0x28] sm:$0xff]
        %v530 = vld [vmem:[#allocation8 + $0x30] sm:$0xff]
        %v531 = vld [vmem:[#allocation8 + $0x38] sm:$0xff]
        %v532 = vld [vmem:[#allocation8 + $0x40] sm:$0xff]
        %v533 = vld [vmem:[#allocation8 + $0x48] sm:$0xff]
        %v534 = vld [vmem:[#allocation8 + $0x50] sm:$0xff]
        %v535 = vld [vmem:[#allocation8 + $0x58] sm:$0xff]
        %v536 = vld [vmem:[#allocation8 + $0x60] sm:$0xff]
        %v537 = vld [vmem:[#allocation8 + $0x68] sm:$0xff]
        %v538 = vld [vmem:[#allocation8 + $0x70] sm:$0xff]
        %v539 = vld [vmem:[#allocation8 + $0x78] sm:$0xff]
        %v540 = vld [vmem:[%s4] sm:$0x1]
        %v542 = vlaneseq
        %v543 = vshrl.u32 %v542, 7
        %v544 = vsub.s32 0, %v543
        %v545 = vrot.slane %v540, %v544
        %vm563 = vcmask 1041409
        %v564 = vsel %vm563, %v439, %v433
        %vm565 = vcmask 1042434
        %v566 = vsel %vm565, %v445, %v564
        %vm567 = vcmask 1043459
        %v568 = vsel %vm567, %v451, %v566
        %vm569 = vcmask 1044484
        %v570 = vsel %vm569, %v457, %v568
        %vm571 = vcmask 1045509
        %v572 = vsel %vm571, %v463, %v570
        %vm573 = vcmask 1046534
        %v574 = vsel %vm573, %v469, %v572
        %vm575 = vcmask 1047559
        %v576 = vsel %vm575, %v475, %v574
        %v577 = vsel %vm563, %v487, %v481
        %v578 = vsel %vm565, %v493, %v577
        %v579 = vsel %vm567, %v499, %v578
        %v580 = vsel %vm569, %v505, %v579
        %v581 = vsel %vm571, %v511, %v580
        %v582 = vsel %vm573, %v517, %v581
        %v583 = vsel %vm575, %v523, %v582
        %586 = vmatprep.subr.mxu0 0.0
        %587 = vmatpush1.msra.mxu0 %v524
        %588 = vmatprep.subr.mxu0 0.0
        %589 = vmatpush1.msra.mxu0 %v525
        %590 = vmatprep.subr.mxu0 0.0
        %591 = vmatpush1.msra.mxu0 %v526
        %592 = vmatprep.subr.mxu0 0.0
        %593 = vmatpush1.msra.mxu0 %v527
        %594 = vmatprep.subr.mxu0 0.0
        %595 = vmatpush1.msra.mxu0 %v528
        %596 = vmatprep.subr.mxu0 0.0
        %597 = vmatpush1.msra.mxu0 %v529
        %598 = vmatprep.subr.mxu0 0.0
        %599 = vmatpush1.msra.mxu0 %v530
        %600 = vmatprep.subr.mxu0 0.0
        %601 = vmatpush1.msra.mxu0 %v531
        %602 = vmatprep.subr.mxu0 0.0
        %603 = vmatpush1.msra.mxu0 %v532
        %604 = vmatprep.subr.mxu0 0.0
        %605 = vmatpush1.msra.mxu0 %v533
        %606 = vmatprep.subr.mxu0 0.0
        %607 = vmatpush1.msra.mxu0 %v534
        %608 = vmatprep.subr.mxu0 0.0
        %609 = vmatpush1.msra.mxu0 %v535
        %610 = vmatprep.subr.mxu0 0.0
        %611 = vmatpush1.msra.mxu0 %v536
        %612 = vmatprep.subr.mxu0 0.0
        %613 = vmatpush1.msra.mxu0 %v537
        %614 = vmatprep.subr.mxu0 0.0
        %615 = vmatpush1.msra.mxu0 %v538
        %616 = vmatprep.subr.mxu0 0.0
        %617 = vmatpush1.msra.mxu0 %v539
        %618 = vmatprep.subr.mxu0 0.0
        %619 = vmatpush1.msra.mxu0 0.0
        %620 = vmatprep.subr.mxu0 0.0
        %621 = vmatpush1.msra.mxu0 0.0
        %622 = vmatprep.subr.mxu0 0.0
        %623 = vmatpush1.msra.mxu0 0.0
        %624 = vmatprep.subr.mxu0 0.0
        %625 = vmatpush1.msra.mxu0 0.0
        %626 = vmatprep.subr.mxu0 0.0
        %627 = vmatpush1.msra.mxu0 0.0
        %628 = vmatprep.subr.mxu0 0.0
        %629 = vmatpush1.msra.mxu0 0.0
        %630 = vmatprep.subr.mxu0 0.0
        %631 = vmatpush1.msra.mxu0 0.0
        %632 = vmatprep.subr.mxu0 0.0
        %633 = vmatpush1.msra.mxu0 0.0
        %634 = vmatprep.subr.mxu0 0.0
        %635 = vmatpush1.msra.mxu0 0.0
        %636 = vmatprep.subr.mxu0 0.0
        %637 = vmatpush1.msra.mxu0 0.0
        %638 = vmatprep.subr.mxu0 0.0
        %639 = vmatpush1.msra.mxu0 0.0
        %640 = vmatprep.subr.mxu0 0.0
        %641 = vmatpush1.msra.mxu0 0.0
        %642 = vmatprep.subr.mxu0 0.0
        %643 = vmatpush1.msra.mxu0 0.0
        %644 = vmatprep.subr.mxu0 0.0
        %645 = vmatpush1.msra.mxu0 0.0
        %646 = vmatprep.subr.mxu0 0.0
        %647 = vmatpush1.msra.mxu0 0.0
        %648 = vmatprep.subr.mxu0 0.0
        %649 = vmatpush1.msra.mxu0 0.0
        %650 = vmatprep.mubr.f32.mxu0 0.0
        %651 = vmatmul.mubr.f32.gmra.mrb[0].mxu0 %v576
        %v652 = vpop.f32.mrb[0].mxu0
        %v653 = vadd.f32 %v545, %v652
        %v654 = vpop.f32.mrb[0].mxu0
        %655 = vmatprep.mubr.f32.mxu0 0.0
        %656 = vmatmul.mubr.f32.gmra.mrb[0].mxu0 %v583
        %v657 = vpop.f32.mrb[0].mxu0
        %v658 = vadd.f32 %v545, %v657
        %v659 = vpop.f32.mrb[0].mxu0
        %660 = vdwg.mxu0
        %v661 = vld [vmem:[%s329] sm:$0xff]
        %v662 = vld [vmem:[%s329 + $0x8] sm:$0xff]
        %v663 = vmul.f32 %v661, 0.5
        %v664 = vmul.f32 %v662, 0.5
        %v665 = vmul.f32 %v653, 0.5
        %v666 = vmul.f32 %v658, 0.5
        %v667 = vadd.f32 %v663, %v665
        %v668 = vadd.f32 %v664, %v666
        %v669 = vld [vmem:[#allocation10] sm:$0xff]
        %v670 = vld [vmem:[#allocation10 + $0x8] sm:$0xff]
        %v671 = vld [vmem:[#allocation10 + $0x10] sm:$0xff]
        %v672 = vld [vmem:[#allocation10 + $0x18] sm:$0xff]
        %v673 = vld [vmem:[#allocation10 + $0x20] sm:$0xff]
        %v674 = vld [vmem:[#allocation10 + $0x28] sm:$0xff]
        %v675 = vld [vmem:[#allocation10 + $0x30] sm:$0xff]
        %v676 = vld [vmem:[#allocation10 + $0x38] sm:$0xff]
        %v677 = vld [vmem:[#allocation10 + $0x40] sm:$0xff]
        %v678 = vld [vmem:[#allocation10 + $0x48] sm:$0xff]
        %v679 = vld [vmem:[#allocation10 + $0x50] sm:$0xff]
        %v680 = vld [vmem:[#allocation10 + $0x58] sm:$0xff]
        %v681 = vld [vmem:[#allocation10 + $0x60] sm:$0xff]
        %v682 = vld [vmem:[#allocation10 + $0x68] sm:$0xff]
        %v683 = vld [vmem:[#allocation10 + $0x70] sm:$0xff]
        %v684 = vld [vmem:[#allocation10 + $0x78] sm:$0xff]
        %v685 = vld [vmem:[#allocation10 + $0x80] sm:$0xff]
        %v686 = vld [vmem:[#allocation10 + $0x88] sm:$0xff]
        %v687 = vld [vmem:[#allocation10 + $0x90] sm:$0xff]
        %v688 = vld [vmem:[#allocation10 + $0x98] sm:$0xff]
        %v689 = vld [vmem:[#allocation10 + $0xa0] sm:$0xff]
        %v690 = vld [vmem:[#allocation10 + $0xa8] sm:$0xff]
        %v691 = vld [vmem:[#allocation10 + $0xb0] sm:$0xff]
        %v692 = vld [vmem:[#allocation10 + $0xb8] sm:$0xff]
        %v693 = vld [vmem:[#allocation10 + $0xc0] sm:$0xff]
        %v694 = vld [vmem:[#allocation10 + $0xc8] sm:$0xff]
        %v695 = vld [vmem:[#allocation10 + $0xd0] sm:$0xff]
        %v696 = vld [vmem:[#allocation10 + $0xd8] sm:$0xff]
        %v697 = vld [vmem:[#allocation10 + $0xe0] sm:$0xff]
        %v698 = vld [vmem:[#allocation10 + $0xe8] sm:$0xff]
        %v699 = vld [vmem:[#allocation10 + $0xf0] sm:$0xff]
        %v700 = vld [vmem:[#allocation10 + $0xf8] sm:$0xff]
        %701 = vmatprep.subr.mxu0 %v670
        %702 = vmatpush1.msra.mxu0 %v669
        %703 = vmatprep.subr.mxu0 %v672
        %704 = vmatpush1.msra.mxu0 %v671
        %705 = vmatprep.subr.mxu0 %v674
        %706 = vmatpush1.msra.mxu0 %v673
        %707 = vmatprep.subr.mxu0 %v676
        %708 = vmatpush1.msra.mxu0 %v675
        %709 = vmatprep.subr.mxu0 %v678
        %710 = vmatpush1.msra.mxu0 %v677
        %711 = vmatprep.subr.mxu0 %v680
        %712 = vmatpush1.msra.mxu0 %v679
        %713 = vmatprep.subr.mxu0 %v682
        %714 = vmatpush1.msra.mxu0 %v681
        %715 = vmatprep.subr.mxu0 %v684
        %716 = vmatpush1.msra.mxu0 %v683
        %717 = vmatprep.subr.mxu0 %v686
        %718 = vmatpush1.msra.mxu0 %v685
        %719 = vmatprep.subr.mxu0 %v688
        %720 = vmatpush1.msra.mxu0 %v687
        %721 = vmatprep.subr.mxu0 %v690
        %722 = vmatpush1.msra.mxu0 %v689
        %723 = vmatprep.subr.mxu0 %v692
        %724 = vmatpush1.msra.mxu0 %v691
        %725 = vmatprep.subr.mxu0 %v694
        %726 = vmatpush1.msra.mxu0 %v693
        %727 = vmatprep.subr.mxu0 %v696
        %728 = vmatpush1.msra.mxu0 %v695
        %729 = vmatprep.subr.mxu0 %v698
        %730 = vmatpush1.msra.mxu0 %v697
        %731 = vmatprep.subr.mxu0 %v700
        %732 = vmatpush1.msra.mxu0 %v699
        %733 = vmatprep.subr.mxu0 0.0
        %734 = vmatpush1.msra.mxu0 0.0
        %735 = vmatprep.subr.mxu0 0.0
        %736 = vmatpush1.msra.mxu0 0.0
        %737 = vmatprep.subr.mxu0 0.0
        %738 = vmatpush1.msra.mxu0 0.0
        %739 = vmatprep.subr.mxu0 0.0
        %740 = vmatpush1.msra.mxu0 0.0
        %741 = vmatprep.subr.mxu0 0.0
        %742 = vmatpush1.msra.mxu0 0.0
        %743 = vmatprep.subr.mxu0 0.0
        %744 = vmatpush1.msra.mxu0 0.0
        %745 = vmatprep.subr.mxu0 0.0
        %746 = vmatpush1.msra.mxu0 0.0
        %747 = vmatprep.subr.mxu0 0.0
        %748 = vmatpush1.msra.mxu0 0.0
        %749 = vmatprep.subr.mxu0 0.0
        %750 = vmatpush1.msra.mxu0 0.0
        %751 = vmatprep.subr.mxu0 0.0
        %752 = vmatpush1.msra.mxu0 0.0
        %753 = vmatprep.subr.mxu0 0.0
        %754 = vmatpush1.msra.mxu0 0.0
        %755 = vmatprep.subr.mxu0 0.0
        %756 = vmatpush1.msra.mxu0 0.0
        %757 = vmatprep.subr.mxu0 0.0
        %758 = vmatpush1.msra.mxu0 0.0
        %759 = vmatprep.subr.mxu0 0.0
        %760 = vmatpush1.msra.mxu0 0.0
        %761 = vmatprep.subr.mxu0 0.0
        %762 = vmatpush1.msra.mxu0 0.0
        %763 = vmatprep.subr.mxu0 0.0
        %764 = vmatpush1.msra.mxu0 0.0
        %765 = vmatprep.mubr.f32.mxu0 0.0
        %766 = vmatmul.mubr.f32.gmra.mrb[0].mxu0 %v667
        %v767 = vpop.f32.mrb[0].mxu0
        %v768 = vadd.f32 0.0, %v767
        %v769 = vpop.f32.mrb[0].mxu0
        %v770 = vadd.f32 0.0, %v769
        %771 = vmatprep.mubr.f32.mxu0 0.0
        %772 = vmatmul.mubr.f32.gmra.mrb[0].mxu0 %v668
        %v773 = vpop.f32.mrb[0].mxu0
        %v774 = vadd.f32 0.0, %v773
        %v775 = vpop.f32.mrb[0].mxu0
        %v776 = vadd.f32 0.0, %v775
        %777 = vdwg.mxu0
        %778 = vst [vmem:[%s375] sm:$0xff] %v768
        %779 = vst [vmem:[%s375 + $0x8] sm:$0xff] %v770
        %780 = vst [vmem:[%s375 + $0x10] sm:$0xff] %v774
        %781 = vst [vmem:[%s375 + $0x18] sm:$0xff] %v776
        %s782 = sand.u32 %s176, 1
        %s783 = scalar_lea.sflag [#allocation4], %s782
        %s784 = sand.u32 %s176, 1
        %s785 = smul.addr %s784, 32
        %s786 = scalar_lea.vmem [#allocation11], %s785
        // Predicated region
        $region65: #{tpu_custom_call.1} parent=43 // pred_check
          %p787 = pneg %p186
        $region66: #{tpu_custom_call.1} parent=43 // pred_check_branch
          %789 = sbr.rel (%p787) target = $region68
        $region67: #{tpu_custom_call.1} parent=43 // pred_region
          %s790 = smul.u32 2, %s27
          %s792 = ssub.s32 512, 512
          %793 = vsyncadd %s783, %s792
          %s794 = smul.addr %s790, 2
          %s795 = smul.addr %s794, 128
          %s796 = scalar_lea.hbm %s6, %s795
          %s797 = sshll.u32 %s786, 4
          %s798 = int_to_ptr.vmem [resolvable:$true] %s797
          %803 = dma.vmem_to_hbm [thread:$0]  %s798, 512, %s796, %s783, 256, 256, 16
        $region68: #{tpu_custom_call.1} parent=43 // pred_fallthru
          _
      $region44: #{tpu_custom_call.1} parent=5 // pred_fallthru
        _
      %p804 = scmp.le.s32.totalorder 2, %s22
      // Predicated region
      $region69: #{tpu_custom_call.1} parent=5 // pred_check
        %p805 = pneg %p804
      $region70: #{tpu_custom_call.1} parent=5 // pred_check_branch
        %807 = sbr.rel (%p805) target = $region72
      $region71: #{tpu_custom_call.1} parent=5 // pred_region
        %s808 = ssub.s32 %s22, 2
        // Predicated region
        $region73: #{tpu_custom_call.1} parent=71 // pred_check
          %p809 = pneg %p192
        $region74: #{tpu_custom_call.1} parent=71 // pred_check_branch
          %811 = sbr.rel (%p809) target = $region76
        $region75: #{tpu_custom_call.1} parent=71 // pred_region
          %s812 = sand.u32 %s177, 1
          %s813 = scalar_lea.sflag [#allocation4], %s812
          %s814 = sand.u32 %s177, 1
          %s815 = smul.addr %s814, 32
          %s816 = scalar_lea.vmem [#allocation11], %s815
          %817 = dma.done %s813, 512
        $region76: #{tpu_custom_call.1} parent=71 // pred_fallthru
          _
      $region72: #{tpu_custom_call.1} parent=5 // pred_fallthru
        _
    $region6: #{tpu_custom_call.1} parent=1 // loop_footer
      %s26 = sadd.s32 1, %s22
    $region7: #{tpu_custom_call.1} parent=1 // loop_footer_branch
      %21 = sbr.rel target = $region3
    $region8: #{tpu_custom_call.1} parent=1 // loop_exit
      _
    %818 = vsyncpa [#allocation3], 1
    %s819 = scalar_lea.sflag [#allocation3], 1
    %820 = vsyncpa %s819, 1
    %821 = vsyncpa [#allocation6], 1
    %s822 = scalar_lea.sflag [#allocation6], 1
    %823 = vsyncpa %s822, 1
    %824 = vsyncpa [#allocation9], 1
    %825 = vsyncpa [#allocation4], 1
    %s826 = scalar_lea.sflag [#allocation4], 1
    %827 = vsyncpa %s826, 1

</llo_original>
